<compile_context>
chip_gen: v5e
topology: v5e:2x2
jax: 0.10.0
libtpu: 0.0.40
codegen_flags: <defaults>
</compile_context>

<pallas_src>
import functools

import jax
import jax.numpy as jnp
from jax.experimental import pallas as pl
from jax.experimental.pallas import tpu as pltpu


LN_EPS = 1e-5            # PyTorch nn.LayerNorm default
LANE = 128               # TPU lane width
SUBLANE = 8              # TPU sublane width
MATMUL_DTYPE = jnp.bfloat16  # MXU-native on v5e/v6e/v7x; accumulation stays f32


def _round_up(x, m):
    return ((x + m - 1) // m) * m


def _make_fused_mlp_kernel(has_norm, real_out_dims):
    """Build a kernel computing the full MLP on one batch tile.

    Ref layout: (x_ref, [w, b, (gamma, beta if hidden)] per layer ..., out_ref).
    `has_norm[i]`      : Python bool, layer i has LayerNorm+SiLU (hidden layer).
    `real_out_dims[i]` : un-padded output width of layer i (LayerNorm divisor).
    """
    n_layers = len(has_norm)

    def kernel(x_ref, *refs):
        out_ref = refs[-1]
        prefs = refs[:-1]
        y = x_ref[...].astype(jnp.float32)
        idx = 0
        for li in range(n_layers):
            w = prefs[idx][...]
            b = prefs[idx + 1][...]
            idx += 2
            # MXU matmul: bf16 operands, f32 accumulation.
            y = jnp.dot(y.astype(MATMUL_DTYPE), w.astype(MATMUL_DTYPE),
                        preferred_element_type=jnp.float32)
            y = y + b.astype(jnp.float32)
            if has_norm[li]:
                g = prefs[idx][...]
                beta = prefs[idx + 1][...]
                idx += 2
                # LayerNorm over the REAL feature width.  Padded lanes of y are
                # exactly zero (zero-padded weights/bias), so sum and sum-of-
                # squares over the padded lane axis are unaffected.
                inv_d = 1.0 / float(real_out_dims[li])
                s1 = jnp.sum(y, axis=-1, keepdims=True)
                s2 = jnp.sum(y * y, axis=-1, keepdims=True)
                mean = s1 * inv_d
                var = s2 * inv_d - mean * mean          # biased variance
                y = (y - mean) * jax.lax.rsqrt(var + LN_EPS)
                # gamma is zero-padded -> padded lanes return to exactly 0 here.
                y = y * g.astype(jnp.float32) + beta.astype(jnp.float32)
                # SiLU
                y = y * jax.nn.sigmoid(y)
                # Dropout: identity in eval mode.
        out_ref[...] = y.astype(out_ref.dtype)

    return kernel


@jax.jit
def mlp_forward(x, params):
    """x: [B, input_dim] f32. params: sequence of dicts of arrays:
       hidden layers: {w:[in,out], b:[1,out], gamma:[1,out], beta:[1,out]}
       final layer:   {w:[in,out], b:[1,out]}.
    """
    B, d_in0 = x.shape
    n_layers = len(params)

    in_dims = [int(p["w"].shape[0]) for p in params]
    out_dims = [int(p["w"].shape[1]) for p in params]
    has_norm = tuple("gamma" in p for p in params)

    pad_in0 = _round_up(d_in0, LANE)
    pad_out = [_round_up(d, LANE) for d in out_dims]
    pad_in = [pad_in0] + pad_out[:-1]

    # --- batch tiling --------------------------------------------------------
    b8 = _round_up(B, SUBLANE)
    tm = min(256, b8)                 # batch tile (multiple of 8)
    B_pad = _round_up(b8, tm)
    grid = (B_pad // tm,)

    # --- zero-pad everything to lane-dense shapes ---------------------------
    xp = jnp.pad(x, ((0, B_pad - B), (0, pad_in0 - d_in0)))

    flat_args = []
    in_specs = [pl.BlockSpec((tm, pad_in0), lambda i: (i, 0))]
    for li, p in enumerate(params):
        dpad_in = pad_in[li] - in_dims[li]
        dpad_out = pad_out[li] - out_dims[li]
        w = jnp.pad(p["w"], ((0, dpad_in), (0, dpad_out)))
        b = jnp.pad(p["b"], ((0, 0), (0, dpad_out)))
        flat_args += [w, b]
        in_specs += [
            pl.BlockSpec((pad_in[li], pad_out[li]), lambda i: (0, 0)),
            pl.BlockSpec((1, pad_out[li]), lambda i: (0, 0)),
        ]
        if "gamma" in p:
            g = jnp.pad(p["gamma"], ((0, 0), (0, dpad_out)))   # pad with 0, not 1
            bt = jnp.pad(p["beta"], ((0, 0), (0, dpad_out)))
            flat_args += [g, bt]
            in_specs += [
                pl.BlockSpec((1, pad_out[li]), lambda i: (0, 0)),
                pl.BlockSpec((1, pad_out[li]), lambda i: (0, 0)),
            ]

    kernel = _make_fused_mlp_kernel(has_norm, tuple(out_dims))

    out_padded = pl.pallas_call(
        kernel,
        out_shape=jax.ShapeDtypeStruct((B_pad, pad_out[-1]), x.dtype),
        grid=grid,
        in_specs=in_specs,
        out_specs=pl.BlockSpec((tm, pad_out[-1]), lambda i: (i, 0)),
        compiler_params=pltpu.CompilerParams(
            dimension_semantics=("parallel",)),
    )(xp, *flat_args)

    return out_padded[:B, :out_dims[-1]]


def init_mlp_params(key, input_dim, hidden_dims, output_dim, dtype=jnp.float32):
    """Matches MLP.reset_parameters(): xavier_uniform_ weights, zero bias;
       LayerNorm gamma=1, beta=0.  Weights stored [in, out] (transposed vs torch)."""
    dims = [input_dim] + list(hidden_dims) + [output_dim]
    params = []
    for i in range(len(dims) - 1):
        d_in, d_out = dims[i], dims[i + 1]
        key, sub = jax.random.split(key)
        bound = (6.0 / (d_in + d_out)) ** 0.5
        w = jax.random.uniform(sub, (d_in, d_out), dtype=dtype,
                               minval=-bound, maxval=bound)
        b = jnp.zeros((1, d_out), dtype=dtype)
        layer = dict(w=w, b=b)
        if (i + 1) < (len(dims) - 1):          # hidden layer
            layer["gamma"] = jnp.ones((1, d_out), dtype=dtype)
            layer["beta"] = jnp.zeros((1, d_out), dtype=dtype)
        params.append(layer)
    return params


def mlp_reference(x, params):
    """Pure-JAX reference (same bf16-MXU / f32-accumulate math as the kernel)."""
    for p in params:
        y = jnp.dot(x.astype(MATMUL_DTYPE), p["w"].astype(MATMUL_DTYPE),
                    preferred_element_type=jnp.float32) + p["b"]
        if "gamma" in p:
            mean = jnp.mean(y, axis=-1, keepdims=True)
            var = jnp.mean((y - mean) ** 2, axis=-1, keepdims=True)
            y = (y - mean) * jax.lax.rsqrt(var + LN_EPS)
            y = y * p["gamma"] + p["beta"]
            y = y * jax.nn.sigmoid(y)
        x = y
    return x


if __name__ == "__main__":
    key = jax.random.PRNGKey(0)
    input_dim, hidden_dims, output_dim = 32, [64, 64], 16
    batch = 8

    kp, kx = jax.random.split(key)
    params = init_mlp_params(kp, input_dim, hidden_dims, output_dim)
    x = jax.random.normal(kx, (batch, input_dim), dtype=jnp.float32)

    out = jax.block_until_ready(mlp_forward(x, params))
    ref = mlp_reference(x, params)

    assert out.shape == (batch, output_dim)
    assert jnp.allclose(out, ref, atol=2e-3, rtol=2e-3), "mismatch vs reference"

    print("KERNEL_OK")
</pallas_src>

<mosaic_0001>
module attributes {stable_mosaic.version = 11 : i64} {
  func.func @kernel(%arg0: i32, %arg1: memref<8x128xf32, #tpu.memory_space<vmem>>, %arg2: memref<128x128xf32, #tpu.memory_space<vmem>>, %arg3: memref<1x128xf32, #tpu.memory_space<vmem>>, %arg4: memref<1x128xf32, #tpu.memory_space<vmem>>, %arg5: memref<1x128xf32, #tpu.memory_space<vmem>>, %arg6: memref<128x128xf32, #tpu.memory_space<vmem>>, %arg7: memref<1x128xf32, #tpu.memory_space<vmem>>, %arg8: memref<1x128xf32, #tpu.memory_space<vmem>>, %arg9: memref<1x128xf32, #tpu.memory_space<vmem>>, %arg10: memref<128x128xf32, #tpu.memory_space<vmem>>, %arg11: memref<1x128xf32, #tpu.memory_space<vmem>>, %arg12: memref<8x128xf32, #tpu.memory_space<vmem>>) attributes {dimension_semantics = [#tpu.dimension_semantics<parallel>], iteration_bounds = array<i64: 1>, scalar_prefetch = 0 : i64, scratch_operands = 0 : i64, tpu.core_type = #tpu.core_type<tc>, window_params = [{transform_indices = @transform_0, window_bounds = array<i64: 8, 128>}, {pipeline_mode = #tpu.pipeline_mode<synchronous>, transform_indices = @transform_1, window_bounds = array<i64: 128, 128>}, {pipeline_mode = #tpu.pipeline_mode<synchronous>, transform_indices = @transform_2, window_bounds = array<i64: 1, 128>}, {pipeline_mode = #tpu.pipeline_mode<synchronous>, transform_indices = @transform_3, window_bounds = array<i64: 1, 128>}, {pipeline_mode = #tpu.pipeline_mode<synchronous>, transform_indices = @transform_4, window_bounds = array<i64: 1, 128>}, {pipeline_mode = #tpu.pipeline_mode<synchronous>, transform_indices = @transform_5, window_bounds = array<i64: 128, 128>}, {pipeline_mode = #tpu.pipeline_mode<synchronous>, transform_indices = @transform_6, window_bounds = array<i64: 1, 128>}, {pipeline_mode = #tpu.pipeline_mode<synchronous>, transform_indices = @transform_7, window_bounds = array<i64: 1, 128>}, {pipeline_mode = #tpu.pipeline_mode<synchronous>, transform_indices = @transform_8, window_bounds = array<i64: 1, 128>}, {pipeline_mode = #tpu.pipeline_mode<synchronous>, transform_indices = @transform_9, window_bounds = array<i64: 128, 128>}, {pipeline_mode = #tpu.pipeline_mode<synchronous>, transform_indices = @transform_10, window_bounds = array<i64: 1, 128>}, {transform_indices = @transform_11, window_bounds = array<i64: 8, 128>}]} {
    %c0 = arith.constant 0 : index
    %c0_0 = arith.constant 0 : index
    %0 = vector.load %arg1[%c0, %c0_0] : memref<8x128xf32, #tpu.memory_space<vmem>>, vector<8x128xf32>
    %c0_1 = arith.constant 0 : index
    %c0_2 = arith.constant 0 : index
    %1 = vector.load %arg2[%c0_1, %c0_2] : memref<128x128xf32, #tpu.memory_space<vmem>>, vector<128x128xf32>
    %c0_3 = arith.constant 0 : index
    %c0_4 = arith.constant 0 : index
    %2 = vector.load %arg3[%c0_3, %c0_4] : memref<1x128xf32, #tpu.memory_space<vmem>>, vector<1x128xf32>
    %3 = arith.truncf %0 : vector<8x128xf32> to vector<8x128xbf16>
    %4 = arith.truncf %1 : vector<128x128xf32> to vector<128x128xbf16>
    %cst = arith.constant dense<0.000000e+00> : vector<8x128xf32>
    %5 = tpu.matmul %3, %4, %cst {dimension_numbers = #tpu.dot_dimension_numbers<[1], [0], [0], [1], [0, 0, 1, 1], [], []>} : vector<8x128xbf16>, vector<128x128xbf16>, vector<8x128xf32> -> vector<8x128xf32>
    %6 = vector.broadcast %2 : vector<1x128xf32> to vector<8x128xf32>
    %7 = arith.addf %5, %6 : vector<8x128xf32>
    %c0_5 = arith.constant 0 : index
    %c0_6 = arith.constant 0 : index
    %8 = vector.load %arg4[%c0_5, %c0_6] : memref<1x128xf32, #tpu.memory_space<vmem>>, vector<1x128xf32>
    %c0_7 = arith.constant 0 : index
    %c0_8 = arith.constant 0 : index
    %9 = vector.load %arg5[%c0_7, %c0_8] : memref<1x128xf32, #tpu.memory_space<vmem>>, vector<1x128xf32>
    %cst_9 = arith.constant dense<0.000000e+00> : vector<8xf32>
    %10 = vector.multi_reduction <add>, %7, %cst_9 [1] : vector<8x128xf32> to vector<8xf32>
    %11 = vector.shape_cast %10 : vector<8xf32> to vector<8x1xf32>
    %12 = arith.mulf %7, %7 : vector<8x128xf32>
    %cst_10 = arith.constant dense<0.000000e+00> : vector<8xf32>
    %13 = vector.multi_reduction <add>, %12, %cst_10 [1] : vector<8x128xf32> to vector<8xf32>
    %14 = vector.shape_cast %13 : vector<8xf32> to vector<8x1xf32>
    %cst_11 = arith.constant 1.562500e-02 : f32
    %15 = vector.broadcast %cst_11 : f32 to vector<8x1xf32>
    %16 = arith.mulf %11, %15 : vector<8x1xf32>
    %cst_12 = arith.constant 1.562500e-02 : f32
    %17 = vector.broadcast %cst_12 : f32 to vector<8x1xf32>
    %18 = arith.mulf %14, %17 : vector<8x1xf32>
    %19 = arith.mulf %16, %16 : vector<8x1xf32>
    %20 = arith.subf %18, %19 : vector<8x1xf32>
    %21 = vector.broadcast %16 : vector<8x1xf32> to vector<8x128xf32>
    %22 = arith.subf %7, %21 : vector<8x128xf32>
    %cst_13 = arith.constant 9.99999974E-6 : f32
    %23 = vector.broadcast %cst_13 : f32 to vector<8x1xf32>
    %24 = arith.addf %20, %23 : vector<8x1xf32>
    %25 = math.rsqrt %24 : vector<8x1xf32>
    %26 = vector.broadcast %25 : vector<8x1xf32> to vector<8x128xf32>
    %27 = arith.mulf %22, %26 : vector<8x128xf32>
    %28 = vector.broadcast %8 : vector<1x128xf32> to vector<8x128xf32>
    %29 = arith.mulf %27, %28 : vector<8x128xf32>
    %30 = vector.broadcast %9 : vector<1x128xf32> to vector<8x128xf32>
    %31 = arith.addf %29, %30 : vector<8x128xf32>
    %32 = arith.negf %31 : vector<8x128xf32>
    %33 = math.exp %32 : vector<8x128xf32>
    %cst_14 = arith.constant 1.000000e+00 : f32
    %34 = vector.broadcast %cst_14 : f32 to vector<8x128xf32>
    %35 = arith.addf %34, %33 : vector<8x128xf32>
    %36 = arith.divf %34, %35 : vector<8x128xf32>
    %37 = arith.mulf %31, %36 : vector<8x128xf32>
    %c0_15 = arith.constant 0 : index
    %c0_16 = arith.constant 0 : index
    %38 = vector.load %arg6[%c0_15, %c0_16] : memref<128x128xf32, #tpu.memory_space<vmem>>, vector<128x128xf32>
    %c0_17 = arith.constant 0 : index
    %c0_18 = arith.constant 0 : index
    %39 = vector.load %arg7[%c0_17, %c0_18] : memref<1x128xf32, #tpu.memory_space<vmem>>, vector<1x128xf32>
    %40 = arith.truncf %37 : vector<8x128xf32> to vector<8x128xbf16>
    %41 = arith.truncf %38 : vector<128x128xf32> to vector<128x128xbf16>
    %cst_19 = arith.constant dense<0.000000e+00> : vector<8x128xf32>
    %42 = tpu.matmul %40, %41, %cst_19 {dimension_numbers = #tpu.dot_dimension_numbers<[1], [0], [0], [1], [0, 0, 1, 1], [], []>} : vector<8x128xbf16>, vector<128x128xbf16>, vector<8x128xf32> -> vector<8x128xf32>
    %43 = vector.broadcast %39 : vector<1x128xf32> to vector<8x128xf32>
    %44 = arith.addf %42, %43 : vector<8x128xf32>
    %c0_20 = arith.constant 0 : index
    %c0_21 = arith.constant 0 : index
    %45 = vector.load %arg8[%c0_20, %c0_21] : memref<1x128xf32, #tpu.memory_space<vmem>>, vector<1x128xf32>
    %c0_22 = arith.constant 0 : index
    %c0_23 = arith.constant 0 : index
    %46 = vector.load %arg9[%c0_22, %c0_23] : memref<1x128xf32, #tpu.memory_space<vmem>>, vector<1x128xf32>
    %cst_24 = arith.constant dense<0.000000e+00> : vector<8xf32>
    %47 = vector.multi_reduction <add>, %44, %cst_24 [1] : vector<8x128xf32> to vector<8xf32>
    %48 = vector.shape_cast %47 : vector<8xf32> to vector<8x1xf32>
    %49 = arith.mulf %44, %44 : vector<8x128xf32>
    %cst_25 = arith.constant dense<0.000000e+00> : vector<8xf32>
    %50 = vector.multi_reduction <add>, %49, %cst_25 [1] : vector<8x128xf32> to vector<8xf32>
    %51 = vector.shape_cast %50 : vector<8xf32> to vector<8x1xf32>
    %cst_26 = arith.constant 1.562500e-02 : f32
    %52 = vector.broadcast %cst_26 : f32 to vector<8x1xf32>
    %53 = arith.mulf %48, %52 : vector<8x1xf32>
    %cst_27 = arith.constant 1.562500e-02 : f32
    %54 = vector.broadcast %cst_27 : f32 to vector<8x1xf32>
    %55 = arith.mulf %51, %54 : vector<8x1xf32>
    %56 = arith.mulf %53, %53 : vector<8x1xf32>
    %57 = arith.subf %55, %56 : vector<8x1xf32>
    %58 = vector.broadcast %53 : vector<8x1xf32> to vector<8x128xf32>
    %59 = arith.subf %44, %58 : vector<8x128xf32>
    %cst_28 = arith.constant 9.99999974E-6 : f32
    %60 = vector.broadcast %cst_28 : f32 to vector<8x1xf32>
    %61 = arith.addf %57, %60 : vector<8x1xf32>
    %62 = math.rsqrt %61 : vector<8x1xf32>
    %63 = vector.broadcast %62 : vector<8x1xf32> to vector<8x128xf32>
    %64 = arith.mulf %59, %63 : vector<8x128xf32>
    %65 = vector.broadcast %45 : vector<1x128xf32> to vector<8x128xf32>
    %66 = arith.mulf %64, %65 : vector<8x128xf32>
    %67 = vector.broadcast %46 : vector<1x128xf32> to vector<8x128xf32>
    %68 = arith.addf %66, %67 : vector<8x128xf32>
    %69 = arith.negf %68 : vector<8x128xf32>
    %70 = math.exp %69 : vector<8x128xf32>
    %cst_29 = arith.constant 1.000000e+00 : f32
    %71 = vector.broadcast %cst_29 : f32 to vector<8x128xf32>
    %72 = arith.addf %71, %70 : vector<8x128xf32>
    %73 = arith.divf %71, %72 : vector<8x128xf32>
    %74 = arith.mulf %68, %73 : vector<8x128xf32>
    %c0_30 = arith.constant 0 : index
    %c0_31 = arith.constant 0 : index
    %75 = vector.load %arg10[%c0_30, %c0_31] : memref<128x128xf32, #tpu.memory_space<vmem>>, vector<128x128xf32>
    %c0_32 = arith.constant 0 : index
    %c0_33 = arith.constant 0 : index
    %76 = vector.load %arg11[%c0_32, %c0_33] : memref<1x128xf32, #tpu.memory_space<vmem>>, vector<1x128xf32>
    %77 = arith.truncf %74 : vector<8x128xf32> to vector<8x128xbf16>
    %78 = arith.truncf %75 : vector<128x128xf32> to vector<128x128xbf16>
    %cst_34 = arith.constant dense<0.000000e+00> : vector<8x128xf32>
    %79 = tpu.matmul %77, %78, %cst_34 {dimension_numbers = #tpu.dot_dimension_numbers<[1], [0], [0], [1], [0, 0, 1, 1], [], []>} : vector<8x128xbf16>, vector<128x128xbf16>, vector<8x128xf32> -> vector<8x128xf32>
    %80 = vector.broadcast %76 : vector<1x128xf32> to vector<8x128xf32>
    %81 = arith.addf %79, %80 : vector<8x128xf32>
    %c0_35 = arith.constant 0 : index
    %c0_36 = arith.constant 0 : index
    %82 = vector.load %arg12[%c0_35, %c0_36] : memref<8x128xf32, #tpu.memory_space<vmem>>, vector<8x128xf32>
    tpu.vector_store %arg12[%c0_35, %c0_36], %81 {strides = array<i32>} : memref<8x128xf32, #tpu.memory_space<vmem>>, vector<8x128xf32>,
    return
  }
  func.func @transform_0(%arg0: i32) -> (i32, i32) {
    %c0_i32 = arith.constant 0 : i32
    %c0_i32_0 = arith.constant 0 : i32
    return %arg0, %c0_i32 : i32, i32
  }
  func.func @transform_1(%arg0: i32) -> (i32, i32) {
    %c0_i32 = arith.constant 0 : i32
    %c0_i32_0 = arith.constant 0 : i32
    %c0_i32_1 = arith.constant 0 : i32
    return %c0_i32, %c0_i32_0 : i32, i32
  }
  func.func @transform_2(%arg0: i32) -> (i32, i32) {
    %c0_i32 = arith.constant 0 : i32
    %c0_i32_0 = arith.constant 0 : i32
    %c0_i32_1 = arith.constant 0 : i32
    return %c0_i32, %c0_i32_0 : i32, i32
  }
  func.func @transform_3(%arg0: i32) -> (i32, i32) {
    %c0_i32 = arith.constant 0 : i32
    %c0_i32_0 = arith.constant 0 : i32
    %c0_i32_1 = arith.constant 0 : i32
    return %c0_i32, %c0_i32_0 : i32, i32
  }
  func.func @transform_4(%arg0: i32) -> (i32, i32) {
    %c0_i32 = arith.constant 0 : i32
    %c0_i32_0 = arith.constant 0 : i32
    %c0_i32_1 = arith.constant 0 : i32
    return %c0_i32, %c0_i32_0 : i32, i32
  }
  func.func @transform_5(%arg0: i32) -> (i32, i32) {
    %c0_i32 = arith.constant 0 : i32
    %c0_i32_0 = arith.constant 0 : i32
    %c0_i32_1 = arith.constant 0 : i32
    return %c0_i32, %c0_i32_0 : i32, i32
  }
  func.func @transform_6(%arg0: i32) -> (i32, i32) {
    %c0_i32 = arith.constant 0 : i32
    %c0_i32_0 = arith.constant 0 : i32
    %c0_i32_1 = arith.constant 0 : i32
    return %c0_i32, %c0_i32_0 : i32, i32
  }
  func.func @transform_7(%arg0: i32) -> (i32, i32) {
    %c0_i32 = arith.constant 0 : i32
    %c0_i32_0 = arith.constant 0 : i32
    %c0_i32_1 = arith.constant 0 : i32
    return %c0_i32, %c0_i32_0 : i32, i32
  }
  func.func @transform_8(%arg0: i32) -> (i32, i32) {
    %c0_i32 = arith.constant 0 : i32
    %c0_i32_0 = arith.constant 0 : i32
    %c0_i32_1 = arith.constant 0 : i32
    return %c0_i32, %c0_i32_0 : i32, i32
  }
  func.func @transform_9(%arg0: i32) -> (i32, i32) {
    %c0_i32 = arith.constant 0 : i32
    %c0_i32_0 = arith.constant 0 : i32
    %c0_i32_1 = arith.constant 0 : i32
    return %c0_i32, %c0_i32_0 : i32, i32
  }
  func.func @transform_10(%arg0: i32) -> (i32, i32) {
    %c0_i32 = arith.constant 0 : i32
    %c0_i32_0 = arith.constant 0 : i32
    %c0_i32_1 = arith.constant 0 : i32
    return %c0_i32, %c0_i32_0 : i32, i32
  }
  func.func @transform_11(%arg0: i32) -> (i32, i32) {
    %c0_i32 = arith.constant 0 : i32
    %c0_i32_0 = arith.constant 0 : i32
    return %arg0, %c0_i32 : i32, i32
  }
}

</mosaic_0001>

<llo_original>
// kernel: mlp_forward.1
$region0: #{mlp_forward.1}
  #allocation0 [shape = 'u32[]', space=smem, size = 0x4, offset = 0x4, fixed_abs, tag = 'smem constant byte address 0x4 - core index']
  #allocation1 [shape = 'u32[72,128]{1,0:T(1,128)}', space=vmem, size = 0x9000, scoped, tag = 'internal scratch']
  %s0 = inlined_call_operand.vmem [shape: f32[8,128], index: 0, kind: input, shape index: {}]
  %s1 = inlined_call_operand.vmem [shape: f32[128,128], index: 1, kind: input, shape index: {}]
  %s2 = inlined_call_operand.vmem [shape: f32[1,128], index: 2, kind: input, shape index: {}]
  %s3 = inlined_call_operand.vmem [shape: f32[1,128], index: 3, kind: input, shape index: {}]
  %s4 = inlined_call_operand.vmem [shape: f32[1,128], index: 4, kind: input, shape index: {}]
  %s5 = inlined_call_operand.vmem [shape: f32[128,128], index: 5, kind: input, shape index: {}]
  %s6 = inlined_call_operand.vmem [shape: f32[1,128], index: 6, kind: input, shape index: {}]
  %s7 = inlined_call_operand.vmem [shape: f32[1,128], index: 7, kind: input, shape index: {}]
  %s8 = inlined_call_operand.vmem [shape: f32[1,128], index: 8, kind: input, shape index: {}]
  %s9 = inlined_call_operand.vmem [shape: f32[128,128], index: 9, kind: input, shape index: {}]
  %s10 = inlined_call_operand.vmem [shape: f32[1,128], index: 10, kind: input, shape index: {}]
  %s11 = inlined_call_operand.hbm [shape: f32[8,128], index: 11, kind: output, shape index: {}]
  %s12 = sld [smem:[#allocation0]]
  $region54: #{mlp_forward.1} parent=0
    _
  %s14 = ssub.s32 1, %s12
  %s15 = scalar_select 0, %s14, %s12
  $region1: #{mlp_forward.1} parent=0
    #allocation2 [shape = 'u8[4096]{0}', space=vmem, size = 0x1000, scoped, tag = 'output window, operand 0, single buffered']
    #allocation3 [shape = 's32[1]{0}', space=sflag, size = 0x4, scoped, tag = 'scoped memory for mlp_forward.1']
    %16 = vsyncpa [#allocation3], 0
    // Predicated region
    $region2: #{mlp_forward.1} parent=1 // pred_check
      _
    $region3: #{mlp_forward.1} parent=1 // pred_check_branch
      %18 = sbr.rel (0) target = $region5
    $region4: #{mlp_forward.1} parent=1 // pred_region
      _
    $region5: #{mlp_forward.1} parent=1 // pred_fallthru
      _
    // Predicated region
    $region6: #{mlp_forward.1} parent=1 // pred_check
      _
    $region7: #{mlp_forward.1} parent=1 // pred_check_branch
      %20 = sbr.rel (0) target = $region9
    $region8: #{mlp_forward.1} parent=1 // pred_region
      _
    $region9: #{mlp_forward.1} parent=1 // pred_fallthru
      _
    // Predicated region
    $region10: #{mlp_forward.1} parent=1 // pred_check
      _
    $region11: #{mlp_forward.1} parent=1 // pred_check_branch
      %22 = sbr.rel (0) target = $region13
    $region12: #{mlp_forward.1} parent=1 // pred_region
      _
    $region13: #{mlp_forward.1} parent=1 // pred_fallthru
      _
    // Predicated region
    $region14: #{mlp_forward.1} parent=1 // pred_check
      _
    $region15: #{mlp_forward.1} parent=1 // pred_check_branch
      %24 = sbr.rel (0) target = $region17
    $region16: #{mlp_forward.1} parent=1 // pred_region
      _
    $region17: #{mlp_forward.1} parent=1 // pred_fallthru
      _
    // Predicated region
    $region18: #{mlp_forward.1} parent=1 // pred_check
      _
    $region19: #{mlp_forward.1} parent=1 // pred_check_branch
      %26 = sbr.rel (0) target = $region21
    $region20: #{mlp_forward.1} parent=1 // pred_region
      _
    $region21: #{mlp_forward.1} parent=1 // pred_fallthru
      _
    // Predicated region
    $region22: #{mlp_forward.1} parent=1 // pred_check
      _
    $region23: #{mlp_forward.1} parent=1 // pred_check_branch
      %28 = sbr.rel (0) target = $region25
    $region24: #{mlp_forward.1} parent=1 // pred_region
      _
    $region25: #{mlp_forward.1} parent=1 // pred_fallthru
      _
    // Predicated region
    $region26: #{mlp_forward.1} parent=1 // pred_check
      _
    $region27: #{mlp_forward.1} parent=1 // pred_check_branch
      %30 = sbr.rel (0) target = $region29
    $region28: #{mlp_forward.1} parent=1 // pred_region
      _
    $region29: #{mlp_forward.1} parent=1 // pred_fallthru
      _
    // Predicated region
    $region30: #{mlp_forward.1} parent=1 // pred_check
      _
    $region31: #{mlp_forward.1} parent=1 // pred_check_branch
      %32 = sbr.rel (0) target = $region33
    $region32: #{mlp_forward.1} parent=1 // pred_region
      _
    $region33: #{mlp_forward.1} parent=1 // pred_fallthru
      _
    // Predicated region
    $region34: #{mlp_forward.1} parent=1 // pred_check
      _
    $region35: #{mlp_forward.1} parent=1 // pred_check_branch
      %34 = sbr.rel (0) target = $region37
    $region36: #{mlp_forward.1} parent=1 // pred_region
      _
    $region37: #{mlp_forward.1} parent=1 // pred_fallthru
      _
    // Predicated region
    $region38: #{mlp_forward.1} parent=1 // pred_check
      _
    $region39: #{mlp_forward.1} parent=1 // pred_check_branch
      %36 = sbr.rel (0) target = $region41
    $region40: #{mlp_forward.1} parent=1 // pred_region
      _
    $region41: #{mlp_forward.1} parent=1 // pred_fallthru
      _
    // Predicated region
    $region42: #{mlp_forward.1} parent=1 // pred_check
      _
    $region43: #{mlp_forward.1} parent=1 // pred_check_branch
      %38 = sbr.rel (0) target = $region45
    $region44: #{mlp_forward.1} parent=1 // pred_region
      _
    $region45: #{mlp_forward.1} parent=1 // pred_fallthru
      _
    %v39 = vld [vmem:[%s0] sm:$0xff]
    %v40 = vld [vmem:[%s1] sm:$0xff]
    %v41 = vld [vmem:[%s1 + $0x8] sm:$0xff]
    %v42 = vld [vmem:[%s1 + $0x10] sm:$0xff]
    %v43 = vld [vmem:[%s1 + $0x18] sm:$0xff]
    %v44 = vld [vmem:[%s1 + $0x20] sm:$0xff]
    %v45 = vld [vmem:[%s1 + $0x28] sm:$0xff]
    %v46 = vld [vmem:[%s1 + $0x30] sm:$0xff]
    %v47 = vld [vmem:[%s1 + $0x38] sm:$0xff]
    %v48 = vld [vmem:[%s1 + $0x40] sm:$0xff]
    %v49 = vld [vmem:[%s1 + $0x48] sm:$0xff]
    %v50 = vld [vmem:[%s1 + $0x50] sm:$0xff]
    %v51 = vld [vmem:[%s1 + $0x58] sm:$0xff]
    %v52 = vld [vmem:[%s1 + $0x60] sm:$0xff]
    %v53 = vld [vmem:[%s1 + $0x68] sm:$0xff]
    %v54 = vld [vmem:[%s1 + $0x70] sm:$0xff]
    %v55 = vld [vmem:[%s1 + $0x78] sm:$0xff]
    %v56 = vld [vmem:[%s2] sm:$0x1]
    %v57 = vpack.c.bf16 %v39, %v39
    %v58 = vpack.c.bf16 %v41, %v40
    %v59 = vpack.c.bf16 %v43, %v42
    %v60 = vpack.c.bf16 %v45, %v44
    %v61 = vpack.c.bf16 %v47, %v46
    %v62 = vpack.c.bf16 %v49, %v48
    %v63 = vpack.c.bf16 %v51, %v50
    %v64 = vpack.c.bf16 %v53, %v52
    %v65 = vpack.c.bf16 %v55, %v54
    %v67 = vperm.slane %v56, 0
    %69 = vmatpush.bf16.msra.mxu0 %v65
    %70 = vmatpush.bf16.msra.mxu0 %v64
    %71 = vmatpush.bf16.msra.mxu0 %v63
    %72 = vmatpush.bf16.msra.mxu0 %v62
    %73 = vmatpush.bf16.msra.mxu0 %v61
    %74 = vmatpush.bf16.msra.mxu0 %v60
    %75 = vmatpush.bf16.msra.mxu0 %v59
    %76 = vmatpush.bf16.msra.mxu0 %v58
    %77 = vmatmul.bf16.gmra.mxu0 %v57
    %v78 = vpop.f32.mrf.mxu0
    %v79 = vadd.f32 %v67, %v78
    %v80 = vpop.f32.mrf.mxu0
    %81 = vdwg.mxu0
    %v82 = vld [vmem:[%s3] sm:$0x1]
    %v83 = vld [vmem:[%s4] sm:$0x1]
    %84 = vadd.xlane.f32.xlu0 %v79
    %v85 = vpop.xlane.xlu0 %84
    %v86 = vmul.f32 %v79, %v79
    %87 = vadd.xlane.f32.xlu0 %v86
    %v88 = vpop.xlane.xlu0 %87
    %v89 = vmul.f32 %v85, 0.015625
    %v90 = vmul.f32 %v88, 0.015625
    %v91 = vmul.f32 %v89, %v89
    %v92 = vsub.f32 %v90, %v91
    %v93 = vsub.f32 %v79, %v89
    %v94 = vadd.f32 %v92, 1e-05
    %v95 = vrsqrt.pop %v94
    %v96 = vmul.f32 %v95, %v94
    %v97 = vmul.f32 %v96, %v95
    %v98 = vmul.f32 0.5, %v97
    %v99 = vsub.f32 1.5, %v98
    %v100 = vmul.f32 %v95, %v99
    %vm101 = vweird.f32 %v94
    %vm102 = vweird.f32 %v95
    %vm103 = vmor %vm101, %vm102
    %v104 = vsel %vm103, %v95, %v100
    %v105 = vmul.f32 %v93, %v104
    %v107 = vperm.slane %v82, 0
    %v109 = vmul.f32 %v105, %v107
    %v111 = vperm.slane %v83, 0
    %v113 = vadd.f32 %v109, %v111
    %v114 = vxor.u32 %v113, 2147483648
    %v115 = vmul.f32 %v114, 1.442695
    %v116 = vpow.pop %v115
    %v117 = vadd.f32 %v116, 1.0
    %v118 = vrcp.pop %v117
    %v119 = vmul.f32 %v117, %v118
    %v120 = vsub.f32 1.0, %v119
    %v121 = vmul.f32 %v118, %v120
    %v122 = vadd.f32 %v118, %v121
    %vm123 = vweird.f32 %v117
    %vm124 = vweird.f32 %v118
    %vm125 = vmor %vm123, %vm124
    %v126 = vsel %vm125, %v118, %v122
    %v127 = vand.u32 2147483647, %v117
    %vm128 = vcmp.eq.f32.partialorder %v127, 8.507059e+37
    %v129 = vand.u32 %v117, 2147483648
    %v130 = vor.u32 1.1754944e-38, %v129
    %v131 = vsel %vm128, %v130, %v126
    %v132 = vmul.f32 1.0, %v131
    %v133 = vmul.f32 %v113, %v132
    %v134 = vld [vmem:[%s5] sm:$0xff]
    %v135 = vld [vmem:[%s5 + $0x8] sm:$0xff]
    %v136 = vld [vmem:[%s5 + $0x10] sm:$0xff]
    %v137 = vld [vmem:[%s5 + $0x18] sm:$0xff]
    %v138 = vld [vmem:[%s5 + $0x20] sm:$0xff]
    %v139 = vld [vmem:[%s5 + $0x28] sm:$0xff]
    %v140 = vld [vmem:[%s5 + $0x30] sm:$0xff]
    %v141 = vld [vmem:[%s5 + $0x38] sm:$0xff]
    %v142 = vld [vmem:[%s5 + $0x40] sm:$0xff]
    %v143 = vld [vmem:[%s5 + $0x48] sm:$0xff]
    %v144 = vld [vmem:[%s5 + $0x50] sm:$0xff]
    %v145 = vld [vmem:[%s5 + $0x58] sm:$0xff]
    %v146 = vld [vmem:[%s5 + $0x60] sm:$0xff]
    %v147 = vld [vmem:[%s5 + $0x68] sm:$0xff]
    %v148 = vld [vmem:[%s5 + $0x70] sm:$0xff]
    %v149 = vld [vmem:[%s5 + $0x78] sm:$0xff]
    %v150 = vld [vmem:[%s6] sm:$0x1]
    %v151 = vpack.c.bf16 %v133, %v133
    %v152 = vpack.c.bf16 %v135, %v134
    %v153 = vpack.c.bf16 %v137, %v136
    %v154 = vpack.c.bf16 %v139, %v138
    %v155 = vpack.c.bf16 %v141, %v140
    %v156 = vpack.c.bf16 %v143, %v142
    %v157 = vpack.c.bf16 %v145, %v144
    %v158 = vpack.c.bf16 %v147, %v146
    %v159 = vpack.c.bf16 %v149, %v148
    %v161 = vperm.slane %v150, 0
    %163 = vmatpush.bf16.msra.mxu0 %v159
    %164 = vmatpush.bf16.msra.mxu0 %v158
    %165 = vmatpush.bf16.msra.mxu0 %v157
    %166 = vmatpush.bf16.msra.mxu0 %v156
    %167 = vmatpush.bf16.msra.mxu0 %v155
    %168 = vmatpush.bf16.msra.mxu0 %v154
    %169 = vmatpush.bf16.msra.mxu0 %v153
    %170 = vmatpush.bf16.msra.mxu0 %v152
    %171 = vmatmul.bf16.gmra.mxu0 %v151
    %v172 = vpop.f32.mrf.mxu0
    %v173 = vadd.f32 %v161, %v172
    %v174 = vpop.f32.mrf.mxu0
    %175 = vdwg.mxu0
    %v176 = vld [vmem:[%s7] sm:$0x1]
    %v177 = vld [vmem:[%s8] sm:$0x1]
    %178 = vadd.xlane.f32.xlu0 %v173
    %v179 = vpop.xlane.xlu0 %178
    %v180 = vmul.f32 %v173, %v173
    %181 = vadd.xlane.f32.xlu0 %v180
    %v182 = vpop.xlane.xlu0 %181
    %v183 = vmul.f32 %v179, 0.015625
    %v184 = vmul.f32 %v182, 0.015625
    %v185 = vmul.f32 %v183, %v183
    %v186 = vsub.f32 %v184, %v185
    %v187 = vsub.f32 %v173, %v183
    %v188 = vadd.f32 %v186, 1e-05
    %v189 = vrsqrt.pop %v188
    %v190 = vmul.f32 %v189, %v188
    %v191 = vmul.f32 %v190, %v189
    %v192 = vmul.f32 0.5, %v191
    %v193 = vsub.f32 1.5, %v192
    %v194 = vmul.f32 %v189, %v193
    %vm195 = vweird.f32 %v188
    %vm196 = vweird.f32 %v189
    %vm197 = vmor %vm195, %vm196
    %v198 = vsel %vm197, %v189, %v194
    %v199 = vmul.f32 %v187, %v198
    %v201 = vperm.slane %v176, 0
    %v203 = vmul.f32 %v199, %v201
    %v205 = vperm.slane %v177, 0
    %v207 = vadd.f32 %v203, %v205
    %v208 = vxor.u32 %v207, 2147483648
    %v209 = vmul.f32 %v208, 1.442695
    %v210 = vpow.pop %v209
    %v211 = vadd.f32 %v210, 1.0
    %v212 = vrcp.pop %v211
    %v213 = vmul.f32 %v211, %v212
    %v214 = vsub.f32 1.0, %v213
    %v215 = vmul.f32 %v212, %v214
    %v216 = vadd.f32 %v212, %v215
    %vm217 = vweird.f32 %v211
    %vm218 = vweird.f32 %v212
    %vm219 = vmor %vm217, %vm218
    %v220 = vsel %vm219, %v212, %v216
    %v221 = vand.u32 2147483647, %v211
    %vm222 = vcmp.eq.f32.partialorder %v221, 8.507059e+37
    %v223 = vand.u32 %v211, 2147483648
    %v224 = vor.u32 1.1754944e-38, %v223
    %v225 = vsel %vm222, %v224, %v220
    %v226 = vmul.f32 1.0, %v225
    %v227 = vmul.f32 %v207, %v226
    %v228 = vld [vmem:[%s9] sm:$0xff]
    %v229 = vld [vmem:[%s9 + $0x8] sm:$0xff]
    %v230 = vld [vmem:[%s9 + $0x10] sm:$0xff]
    %v231 = vld [vmem:[%s9 + $0x18] sm:$0xff]
    %v232 = vld [vmem:[%s9 + $0x20] sm:$0xff]
    %v233 = vld [vmem:[%s9 + $0x28] sm:$0xff]
    %v234 = vld [vmem:[%s9 + $0x30] sm:$0xff]
    %v235 = vld [vmem:[%s9 + $0x38] sm:$0xff]
    %v236 = vld [vmem:[%s9 + $0x40] sm:$0xff]
    %v237 = vld [vmem:[%s9 + $0x48] sm:$0xff]
    %v238 = vld [vmem:[%s9 + $0x50] sm:$0xff]
    %v239 = vld [vmem:[%s9 + $0x58] sm:$0xff]
    %v240 = vld [vmem:[%s9 + $0x60] sm:$0xff]
    %v241 = vld [vmem:[%s9 + $0x68] sm:$0xff]
    %v242 = vld [vmem:[%s9 + $0x70] sm:$0xff]
    %v243 = vld [vmem:[%s9 + $0x78] sm:$0xff]
    %v244 = vld [vmem:[%s10] sm:$0x1]
    %v245 = vpack.c.bf16 %v227, %v227
    %v246 = vpack.c.bf16 %v229, %v228
    %v247 = vpack.c.bf16 %v231, %v230
    %v248 = vpack.c.bf16 %v233, %v232
    %v249 = vpack.c.bf16 %v235, %v234
    %v250 = vpack.c.bf16 %v237, %v236
    %v251 = vpack.c.bf16 %v239, %v238
    %v252 = vpack.c.bf16 %v241, %v240
    %v253 = vpack.c.bf16 %v243, %v242
    %v255 = vperm.slane %v244, 0
    %257 = vmatpush.bf16.msra.mxu0 %v253
    %258 = vmatpush.bf16.msra.mxu0 %v252
    %259 = vmatpush.bf16.msra.mxu0 %v251
    %260 = vmatpush.bf16.msra.mxu0 %v250
    %261 = vmatpush.bf16.msra.mxu0 %v249
    %262 = vmatpush.bf16.msra.mxu0 %v248
    %263 = vmatpush.bf16.msra.mxu0 %v247
    %264 = vmatpush.bf16.msra.mxu0 %v246
    %265 = vmatmul.bf16.gmra.mxu0 %v245
    %v266 = vpop.f32.mrf.mxu0
    %v267 = vadd.f32 %v255, %v266
    %v268 = vpop.f32.mrf.mxu0
    %269 = vdwg.mxu0
    %270 = vst [vmem:[#allocation2] sm:$0xff] %v267
    // Predicated region
    $region46: #{mlp_forward.1} parent=1 // pred_check
      _
    $region47: #{mlp_forward.1} parent=1 // pred_check_branch
      %272 = sbr.rel (0) target = $region49
    $region48: #{mlp_forward.1} parent=1 // pred_region
      %274 = vsyncadd [#allocation3], 0
      %s276 = sshll.u32 [#allocation2], 4
      %s277 = int_to_ptr.vmem [resolvable:$true] %s276
      %s278 = sshll.u32 %s11, 4
      %s279 = int_to_ptr.hbm [resolvable:$true] %s278
      %281 = dma.vmem_to_hbm [thread:$0]  %s277, 128, %s279, [#allocation3]
    $region49: #{mlp_forward.1} parent=1 // pred_fallthru
      _
    // Predicated region
    $region50: #{mlp_forward.1} parent=1 // pred_check
      _
    $region51: #{mlp_forward.1} parent=1 // pred_check_branch
      %283 = sbr.rel (0) target = $region53
    $region52: #{mlp_forward.1} parent=1 // pred_region
      %285 = dma.done [#allocation3], 128
    $region53: #{mlp_forward.1} parent=1 // pred_fallthru
      _
    %286 = vsyncpa [#allocation3], 1

</llo_original>
